<compile_context>
chip_gen: v5e
topology: v5e:2x2
jax: 0.10.0
libtpu: 0.0.40
codegen_flags: <defaults>
</compile_context>

<pallas_src>
import functools

import jax
import jax.numpy as jnp
from jax import lax
from jax.experimental import pallas as pl
from jax.experimental.pallas import tpu as pltpu

LANE = 128
SUBLANE = 8
_MIB = 1024 * 1024


def _pick_tile_rows():
    """Per-chip row-tile size: largest block such that 2 inputs x 2 pipeline
    buffers of f32 (tile_rows, 128) blocks stay well inside physical VMEM
    (v7x: 64 MiB -> 8192 rows; v5e/v6e: 128 MiB -> 8192 rows, capped)."""
    try:
        vmem_cap = int(pltpu.get_tpu_info().vmem_capacity_bytes)
    except Exception:
        vmem_cap = 64 * _MIB                 # conservative (v7x per-TC VMEM)
    per_block = (vmem_cap // 2) // 4         # 4 buffered input blocks <= half
    tile_rows = per_block // (LANE * 4)
    tile_rows = max(1024, min(8192, (tile_rows // SUBLANE) * SUBLANE))
    return tile_rows


def _flat_tiles_kernel(pred_ref, label_ref, psum_ref, *,
                       beta, half_beta, half_inv_beta,
                       tile_rows, rows, mask_tail):
    pred = pred_ref[...].astype(jnp.float32)
    label = label_ref[...].astype(jnp.float32)

    l1 = jnp.abs(pred - label)
    quad = jnp.float32(half_inv_beta) * l1 * l1           # 0.5 * l1^2 / beta
    lin = l1 - jnp.float32(half_beta)                      # l1 - 0.5 * beta
    loss = jnp.where(l1 < jnp.float32(beta), quad, lin)

    # weights*loss = (alpha/max_value) * label * loss; the constant factor is
    # applied once to the final scalar in the wrapper.
    contrib = label * loss

    if mask_tail:
        # Only the LAST grid step can see out-of-bounds (stale/garbage) rows;
        # gate the iota/compare/select there so every other step keeps the
        # minimal VALU path (matters on v7x where VALU ~ DMA per step).
        i = pl.program_id(0)
        last = pl.num_programs(0) - 1

        @pl.when(i == last)
        def _():
            # Mask AFTER computing contrib and BEFORE the reduce so NaN/Inf
            # from garbage rows is dropped by the select.
            row_ids = lax.broadcasted_iota(jnp.int32, contrib.shape, 0)
            valid = (i * tile_rows + row_ids) < rows
            psum_ref[0, 0] = jnp.sum(
                jnp.where(valid, contrib, jnp.float32(0.0)))

        @pl.when(i != last)
        def _():
            psum_ref[0, 0] = jnp.sum(contrib)
    else:
        psum_ref[0, 0] = jnp.sum(contrib)


def _full_block_kernel(pred_ref, label_ref, psum_ref, *,
                       beta, half_beta, half_inv_beta):
    pred = pred_ref[...].astype(jnp.float32)
    label = label_ref[...].astype(jnp.float32)
    l1 = jnp.abs(pred - label)
    loss = jnp.where(l1 < jnp.float32(beta),
                     jnp.float32(half_inv_beta) * l1 * l1,
                     l1 - jnp.float32(half_beta))
    psum_ref[0, 0] = jnp.sum(label * loss)


def _flat_tiles_sum(pred2d, label2d, tile_rows, consts):
    """Sum of label*loss over a (rows, 128) slab via a 1-D parallel grid."""
    rows = pred2d.shape[0]
    if rows <= tile_rows:
        tile_rows_eff, mask_tail = rows, False      # single full-extent block
    else:
        tile_rows_eff, mask_tail = tile_rows, (rows % tile_rows) != 0
    num_tiles = pl.cdiv(rows, tile_rows_eff)

    kernel = functools.partial(_flat_tiles_kernel, tile_rows=tile_rows_eff,
                               rows=rows, mask_tail=mask_tail, **consts)

    block_bytes = tile_rows_eff * LANE * 4           # f32 upper bound
    # 2 inputs x 2 pipeline buffers + headroom; explicit so big tiles are safe
    # even under v5e's 16 MiB scoped-VMEM default (physical is >= 64 MiB).
    vmem_limit = max(32 * _MIB, 4 * block_bytes + 8 * _MIB)
    in_bytes = rows * LANE * (pred2d.dtype.itemsize + label2d.dtype.itemsize)
    cost = pl.CostEstimate(flops=10 * rows * LANE, transcendentals=0,
                           bytes_accessed=in_bytes + num_tiles * 4)

    partials = pl.pallas_call(
        kernel,
        out_shape=jax.ShapeDtypeStruct((num_tiles, 1), jnp.float32),
        grid_spec=pltpu.PrefetchScalarGridSpec(
            num_scalar_prefetch=0,
            grid=(num_tiles,),
            in_specs=[
                pl.BlockSpec((tile_rows_eff, LANE), lambda i: (i, 0)),
                pl.BlockSpec((tile_rows_eff, LANE), lambda i: (i, 0)),
            ],
            # Per-tile scalar partials: no carried accumulator, so the grid
            # axis is parallel (shards across both TensorCores on v7x).
            out_specs=pl.BlockSpec((1, 1), lambda i: (i, 0),
                                   memory_space=pltpu.SMEM),
        ),
        compiler_params=pltpu.CompilerParams(
            dimension_semantics=("parallel",),
            vmem_limit_bytes=int(vmem_limit)),
        cost_estimate=cost,
    )(pred2d, label2d)
    return jnp.sum(partials)


def _full_block_sum(pred2d, label2d, consts):
    """Sum of label*loss over the whole (ragged) array as ONE VMEM block."""
    kernel = functools.partial(_full_block_kernel, **consts)
    n = pred2d.size
    cost = pl.CostEstimate(
        flops=10 * n, transcendentals=0,
        bytes_accessed=n * (pred2d.dtype.itemsize + label2d.dtype.itemsize) + 4)

    out = pl.pallas_call(
        kernel,
        out_shape=jax.ShapeDtypeStruct((1, 1), jnp.float32),
        grid_spec=pltpu.PrefetchScalarGridSpec(
            num_scalar_prefetch=0,
            grid=(1,),
            in_specs=[
                pl.BlockSpec(pred2d.shape, lambda i: (0, 0)),
                pl.BlockSpec(label2d.shape, lambda i: (0, 0)),
            ],
            out_specs=pl.BlockSpec((1, 1), lambda i: (0, 0),
                                   memory_space=pltpu.SMEM),
        ),
        compiler_params=pltpu.CompilerParams(
            dimension_semantics=("arbitrary",),
            vmem_limit_bytes=32 * _MIB),
        cost_estimate=cost,
    )(pred2d, label2d)
    return out[0, 0]


def linear_weighted_smooth_l1_loss(pred, label, beta=1.0, alpha=0.01,
                                   max_value=150, tile_rows=None,
                                   full_block_max_bytes=4 * _MIB):
    assert pred.shape == label.shape, (pred.shape, label.shape)
    n_elems = pred.size
    if n_elems == 0:                      # torch.mean of an empty tensor = nan
        return jnp.array(jnp.nan, jnp.float32)

    if tile_rows is None:
        tile_rows = _pick_tile_rows()
    assert tile_rows > 0 and tile_rows % SUBLANE == 0, tile_rows

    consts = dict(beta=float(beta), half_beta=float(0.5 * beta),
                  half_inv_beta=float(0.5 / beta))

    rem = n_elems % LANE
    if rem == 0:
        # Common case: zero-copy bitcast reshape to a lane-dense slab.
        pred2d = jnp.reshape(pred, (n_elems // LANE, LANE))
        label2d = jnp.reshape(label, (n_elems // LANE, LANE))
        total = _flat_tiles_sum(pred2d, label2d, tile_rows, consts)
    else:
        # Ragged size: collapse leading dims (still a zero-copy reshape) and,
        # if the padded-layout footprint fits comfortably in VMEM, process the
        # whole array as a single full block -> no padded HBM copy at all.
        last = pred.shape[-1] if pred.ndim else 1
        lead = n_elems // last
        padded_bytes = (pl.cdiv(lead, SUBLANE) * SUBLANE *
                        pl.cdiv(last, LANE) * LANE * 4)
        if padded_bytes <= full_block_max_bytes:
            pred2d = jnp.reshape(pred, (lead, last))
            label2d = jnp.reshape(label, (lead, last))
            total = _full_block_sum(pred2d, label2d, consts)
        else:
            # Rare: large AND not a multiple of 128. Pad only the sub-128 tail
            # (zero pad contributes exactly 0: pred=label=0 -> loss=0, w=0).
            # This does materialize one padded copy of the inputs.
            # TODO(synk): copy-free large-ragged path (1-D blocks or
            # pl.BoundedSlice) once that lowering is battle-tested.
            pad = LANE - rem
            pred_f = jnp.pad(jnp.ravel(pred), (0, pad))
            label_f = jnp.pad(jnp.ravel(label), (0, pad))
            rows = pred_f.size // LANE
            total = _flat_tiles_sum(pred_f.reshape(rows, LANE),
                                    label_f.reshape(rows, LANE),
                                    tile_rows, consts)

    # Fold alpha / max_value and the mean divisor into one final scaling.
    scale = jnp.float32(alpha) / (jnp.float32(max_value) * jnp.float32(n_elems))
    return (total * scale).astype(jnp.float32)


def _reference(pred, label, beta=1.0, alpha=0.01, max_value=150):
    pred = pred.astype(jnp.float32)
    label = label.astype(jnp.float32)
    scaled_target = label / max_value
    weights = alpha * scaled_target
    l1 = jnp.abs(pred - label)
    loss = jnp.where(l1 < beta, 0.5 * l1 ** 2 / beta, l1 - 0.5 * beta)
    return jnp.mean(weights * loss)


if __name__ == "__main__":
    key = jax.random.PRNGKey(0)
    ks = jax.random.split(key, 6)

    # 1) Main case: small NCHW regression map, size % 128 == 0, single block.
    shape = (2, 4, 16, 16)
    pred = jax.random.uniform(ks[0], shape, jnp.float32, 0.0, 150.0)
    label = jax.random.uniform(ks[1], shape, jnp.float32, 0.0, 150.0)
    out = jax.block_until_ready(linear_weighted_smooth_l1_loss(pred, label))
    ref = _reference(pred, label)
    assert jnp.allclose(out, ref, rtol=1e-4, atol=1e-6), (out, ref)

    # 2) Multi-tile flat path with a partial, pl.when-gated masked last block
    #    (tile_rows override keeps it small: 192 rows / 80-row tiles).
    shape_b = (2, 4, 24, 128)
    pred_b = jax.random.uniform(ks[2], shape_b, jnp.float32, 0.0, 150.0)
    label_b = jax.random.uniform(ks[3], shape_b, jnp.float32, 0.0, 150.0)
    out_b = jax.block_until_ready(
        linear_weighted_smooth_l1_loss(pred_b, label_b, tile_rows=80))
    ref_b = _reference(pred_b, label_b)
    assert jnp.allclose(out_b, ref_b, rtol=1e-4, atol=1e-6), (out_b, ref_b)

    # 3) Ragged size (% 128 != 0), small -> single full-block kernel, no pad.
    shape_c = (2, 3, 15, 17)
    pred_c = jax.random.uniform(ks[4], shape_c, jnp.float32, 0.0, 150.0)
    label_c = jax.random.uniform(ks[5], shape_c, jnp.float32, 0.0, 150.0)
    out_c = jax.block_until_ready(linear_weighted_smooth_l1_loss(pred_c, label_c))
    ref_c = _reference(pred_c, label_c)
    assert jnp.allclose(out_c, ref_c, rtol=1e-4, atol=1e-6), (out_c, ref_c)

    # 4) Ragged fallback (tail-only pad + masked multi-tile grid), forced by
    #    zeroing the full-block budget so the rare path is exercised too.
    out_d = jax.block_until_ready(
        linear_weighted_smooth_l1_loss(pred_c, label_c, tile_rows=8,
                                       full_block_max_bytes=0))
    assert jnp.allclose(out_d, ref_c, rtol=1e-4, atol=1e-6), (out_d, ref_c)

    print("KERNEL_OK")
</pallas_src>

<mosaic_0001>
module attributes {stable_mosaic.version = 11 : i64} {
  func.func @_flat_tiles_kernel(%arg0: i32, %arg1: memref<16x128xf32, #tpu.memory_space<vmem>>, %arg2: memref<16x128xf32, #tpu.memory_space<vmem>>, %arg3: memref<1x1xf32, #tpu.memory_space<smem>>) attributes {dimension_semantics = [#tpu.dimension_semantics<parallel>], iteration_bounds = array<i64: 1>, scalar_prefetch = 0 : i64, scratch_operands = 0 : i64, tpu.core_type = #tpu.core_type<tc>, window_params = [{transform_indices = @transform_0, window_bounds = array<i64: 16, 128>}, {transform_indices = @transform_1, window_bounds = array<i64: 16, 128>}, {transform_indices = @transform_2, window_bounds = array<i64: 1, 1>}]} {
    %c0 = arith.constant 0 : index
    %c0_0 = arith.constant 0 : index
    %0 = vector.load %arg1[%c0, %c0_0] : memref<16x128xf32, #tpu.memory_space<vmem>>, vector<16x128xf32>
    %c0_1 = arith.constant 0 : index
    %c0_2 = arith.constant 0 : index
    %1 = vector.load %arg2[%c0_1, %c0_2] : memref<16x128xf32, #tpu.memory_space<vmem>>, vector<16x128xf32>
    %2 = arith.subf %0, %1 : vector<16x128xf32>
    %3 = math.absf %2 : vector<16x128xf32>
    %cst = arith.constant 5.000000e-01 : f32
    %4 = vector.broadcast %cst : f32 to vector<16x128xf32>
    %5 = arith.mulf %4, %3 : vector<16x128xf32>
    %6 = arith.mulf %5, %3 : vector<16x128xf32>
    %cst_3 = arith.constant 5.000000e-01 : f32
    %7 = vector.broadcast %cst_3 : f32 to vector<16x128xf32>
    %8 = arith.subf %3, %7 : vector<16x128xf32>
    %cst_4 = arith.constant 1.000000e+00 : f32
    %9 = vector.broadcast %cst_4 : f32 to vector<16x128xf32>
    %10 = arith.cmpf olt, %3, %9 : vector<16x128xf32>
    %11 = arith.select %10, %6, %8 : vector<16x128xi1>, vector<16x128xf32>
    %12 = arith.mulf %1, %11 : vector<16x128xf32>
    %13 = vector.shape_cast %12 : vector<16x128xf32> to vector<1x16x128xf32>
    %cst_5 = arith.constant dense<0.000000e+00> : vector<1xf32>
    %14 = vector.multi_reduction <add>, %13, %cst_5 [1, 2] : vector<1x16x128xf32> to vector<1xf32>
    %15 = vector.shape_cast %14 : vector<1xf32> to vector<1x1x1xf32>
    %16 = vector.extract %15[0, 0, 0] : f32 from vector<1x1x1xf32>
    %c0_6 = arith.constant 0 : index
    %c0_7 = arith.constant 0 : index
    %17 = memref.load %arg3[%c0_6, %c0_7] : memref<1x1xf32, #tpu.memory_space<smem>>
    memref.store %16, %arg3[%c0_6, %c0_7] : memref<1x1xf32, #tpu.memory_space<smem>>
    return
  }
  func.func @transform_0(%arg0: i32) -> (i32, i32) {
    %c0_i32 = arith.constant 0 : i32
    %c0_i32_0 = arith.constant 0 : i32
    return %arg0, %c0_i32 : i32, i32
  }
  func.func @transform_1(%arg0: i32) -> (i32, i32) {
    %c0_i32 = arith.constant 0 : i32
    %c0_i32_0 = arith.constant 0 : i32
    return %arg0, %c0_i32 : i32, i32
  }
  func.func @transform_2(%arg0: i32) -> (i32, i32) {
    %c0_i32 = arith.constant 0 : i32
    %c0_i32_0 = arith.constant 0 : i32
    return %arg0, %c0_i32 : i32, i32
  }
}

</mosaic_0001>

<llo_original>
// kernel: tpu_custom_call.1
$region0: #{tpu_custom_call.1}
  #allocation0 [shape = 'u32[]', space=smem, size = 0x4, offset = 0x4, fixed_abs, tag = 'smem constant byte address 0x4 - core index']
  #allocation1 [shape = 'u32[72,128]{1,0:T(1,128)}', space=vmem, size = 0x9000, scoped, tag = 'internal scratch']
  %s0 = inlined_call_operand.hbm [shape: f32[16,128], index: 0, kind: input, shape index: {}]
  %s1 = inlined_call_operand.hbm [shape: f32[16,128], index: 1, kind: input, shape index: {}]
  %s2 = inlined_call_operand.hbm [shape: f32[1,1], index: 2, kind: output, shape index: {}]
  %s3 = sld [smem:[#allocation0]]
  $region26: #{tpu_custom_call.1} parent=0
    _
  %s5 = ssub.s32 1, %s3
  %s6 = scalar_select 0, %s5, %s3
  $region1: #{tpu_custom_call.1} parent=0
    #allocation2 [shape = 'u8[8192]{0}', space=vmem, size = 0x2000, scoped, tag = 'input window, operand 0, single buffered']
    #allocation3 [shape = 's32[1]{0}', space=sflag, size = 0x4, scoped, tag = 'scoped memory for tpu_custom_call.1']
    #allocation4 [shape = 's32[1]{0}', space=sflag, size = 0x4, scoped, tag = 'scoped memory for tpu_custom_call.1']
    #allocation5 [shape = 'u8[8192]{0}', space=vmem, size = 0x2000, scoped, tag = 'input window, operand 1, single buffered']
    #allocation6 [shape = 's32[1]{0}', space=sflag, size = 0x4, scoped, tag = 'scoped memory for tpu_custom_call.1']
    #allocation7 [shape = 'u8[512]{0}', space=smem, size = 0x200, scoped, tag = 'output window, operand 0, single buffered']
    %7 = vsyncpa [#allocation3], 0
    %8 = vsyncpa [#allocation6], 0
    %9 = vsyncpa [#allocation4], 0
    // Predicated region
    $region2: #{tpu_custom_call.1} parent=1 // pred_check
      _
    $region3: #{tpu_custom_call.1} parent=1 // pred_check_branch
      %11 = sbr.rel (0) target = $region5
    $region4: #{tpu_custom_call.1} parent=1 // pred_region
      %13 = vsyncadd [#allocation3], 0
      %s14 = sshll.u32 %s0, 4
      %s15 = int_to_ptr.hbm [resolvable:$true] %s14
      %s16 = sshll.u32 [#allocation2], 4
      %s17 = int_to_ptr.vmem [resolvable:$true] %s16
      %22 = dma.hbm_to_vmem [thread:$0]  %s15, 256, %s17, [#allocation3], 128, 128, 8
    $region5: #{tpu_custom_call.1} parent=1 // pred_fallthru
      _
    // Predicated region
    $region6: #{tpu_custom_call.1} parent=1 // pred_check
      _
    $region7: #{tpu_custom_call.1} parent=1 // pred_check_branch
      %24 = sbr.rel (0) target = $region9
    $region8: #{tpu_custom_call.1} parent=1 // pred_region
      %26 = vsyncadd [#allocation6], 0
      %s27 = sshll.u32 %s1, 4
      %s28 = int_to_ptr.hbm [resolvable:$true] %s27
      %s29 = sshll.u32 [#allocation5], 4
      %s30 = int_to_ptr.vmem [resolvable:$true] %s29
      %35 = dma.hbm_to_vmem [thread:$0]  %s28, 256, %s30, [#allocation6], 128, 128, 8
    $region9: #{tpu_custom_call.1} parent=1 // pred_fallthru
      _
    // Predicated region
    $region10: #{tpu_custom_call.1} parent=1 // pred_check
      _
    $region11: #{tpu_custom_call.1} parent=1 // pred_check_branch
      %37 = sbr.rel (0) target = $region13
    $region12: #{tpu_custom_call.1} parent=1 // pred_region
      %39 = dma.done [#allocation3], 256
    $region13: #{tpu_custom_call.1} parent=1 // pred_fallthru
      _
    // Predicated region
    $region14: #{tpu_custom_call.1} parent=1 // pred_check
      _
    $region15: #{tpu_custom_call.1} parent=1 // pred_check_branch
      %41 = sbr.rel (0) target = $region17
    $region16: #{tpu_custom_call.1} parent=1 // pred_region
      %43 = dma.done [#allocation6], 256
    $region17: #{tpu_custom_call.1} parent=1 // pred_fallthru
      _
    %v44 = vld [vmem:[#allocation2] sm:$0xff]
    %v45 = vld [vmem:[#allocation2 + $0x8] sm:$0xff]
    %v46 = vld [vmem:[#allocation5] sm:$0xff]
    %v47 = vld [vmem:[#allocation5 + $0x8] sm:$0xff]
    %v48 = vsub.f32 %v44, %v46
    %v49 = vsub.f32 %v45, %v47
    %v50 = vand.u32 2147483647, %v48
    %v51 = vand.u32 2147483647, %v49
    %v52 = vmul.f32 %v50, 0.5
    %v53 = vmul.f32 %v51, 0.5
    %v54 = vmul.f32 %v52, %v50
    %v55 = vmul.f32 %v53, %v51
    %v56 = vsub.f32 %v50, 0.5
    %v57 = vsub.f32 %v51, 0.5
    %vm58 = vcmp.lt.f32.partialorder %v50, 1.0
    %vm59 = vcmp.lt.f32.partialorder %v51, 1.0
    %v60 = vsel %vm58, %v54, %v56
    %v61 = vsel %vm59, %v55, %v57
    %v62 = vmul.f32 %v46, %v60
    %v63 = vmul.f32 %v47, %v61
    %v64 = vadd.f32 %v62, %v63
    %65 = vadd.xlane.f32.xlu0 %v64
    %v66 = vpop.xlane.xlu0 %65
    %v67 = vrot.slane %v66, 4
    %v68 = vadd.f32 %v66, %v67
    %v69 = vrot.slane %v68, 2
    %v70 = vadd.f32 %v68, %v69
    %v71 = vrot.slane %v70, 1
    %v72 = vadd.f32 %v70, %v71
    %s73 = vtos %v72
    %s74 = scalar_lea.smem [#allocation7], 0
    %75 = sst [smem:[%s74]] %s73
    // Predicated region
    $region18: #{tpu_custom_call.1} parent=1 // pred_check
      _
    $region19: #{tpu_custom_call.1} parent=1 // pred_check_branch
      %77 = sbr.rel (0) target = $region21
    $region20: #{tpu_custom_call.1} parent=1 // pred_region
      %79 = vsyncadd [#allocation4], 0
      %s81 = sshll.u32 %s2, 4
      %s82 = int_to_ptr.hbm [resolvable:$true] %s81
      %84 = dma.smem_to_hbm [#allocation7], 16, %s82, [#allocation4]
    $region21: #{tpu_custom_call.1} parent=1 // pred_fallthru
      _
    // Predicated region
    $region22: #{tpu_custom_call.1} parent=1 // pred_check
      _
    $region23: #{tpu_custom_call.1} parent=1 // pred_check_branch
      %86 = sbr.rel (0) target = $region25
    $region24: #{tpu_custom_call.1} parent=1 // pred_region
      %88 = dma.done [#allocation4], 16
    $region25: #{tpu_custom_call.1} parent=1 // pred_fallthru
      _
    %89 = sfence
    %90 = vsyncpa [#allocation3], 1
    %91 = vsyncpa [#allocation6], 1
    %92 = vsyncpa [#allocation4], 1

</llo_original>
